<compile_context>
chip_gen: v7x
topology: tpu7x:2x2x1
jax: 0.10.0
libtpu: 0.0.40
codegen_flags: <defaults>
</compile_context>

<pallas_src>
import math

import jax
import jax.numpy as jnp
import numpy as np
from jax.experimental import pallas as pl
from jax.experimental.pallas import tpu as pltpu


def _round_up(x, m):
    return ((x + m - 1) // m) * m


def _linear_block_kernel(x_ref, w_ref, b_ref, o_ref):
    # x_ref: (B, P, TV)   w_ref: (P, TV)   b_ref: (1, TV)   o_ref: (B, TV)
    # V on the lane axis -> every load / MAC / store is lane-dense.
    p_dim = x_ref.shape[1]
    x = x_ref[...]                            # (B, P, TV)
    w = w_ref[...]                            # (P, TV)
    acc = x[:, 0, :] * w[0:1, :]              # (B, TV)
    for p in range(1, p_dim):                 # static unroll; P is tiny (e.g. 4)
        acc = acc + x[:, p, :] * w[p:p + 1, :]
    inv_p = 1.0 / p_dim                       # mean = sum * (1/P); exact for pow2 P
    o_ref[...] = (acc * inv_p + b_ref[...]).astype(o_ref.dtype)


def _pick_tile_v(B, P, V, budget_bytes):
    """Largest lane-dense (multiple-of-128) voxel tile that divides V and keeps
    the double-buffered working set under `budget_bytes`; split in two only if
    both halves stay >= 512 lanes (v7x megacore gate).  Falls back to a single
    full-extent block when V % 128 != 0 (masked stores, correctness preserved).
    """
    if V % 128 != 0:
        return V

    p_pad = _round_up(P, 8)                   # sublane padding of (P, TV) tiles
    b_pad = _round_up(B, 8)                   # sublane padding of (B, TV) output
    # f32 bytes per voxel lane, x2 for double buffering of every operand.
    bytes_per_v = 4 * 2 * (B * p_pad          # x tile   (B, P->p_pad, TV)
                           + p_pad            # w tile   (P->p_pad, TV)
                           + 8                # bias tile(1->8,     TV)
                           + b_pad)           # out tile (B->b_pad, TV)
    tv_cap = max(128, (budget_bytes // bytes_per_v) // 128 * 128)

    tv = min(V, tv_cap)
    while V % tv != 0:                        # largest multiple-of-128 divisor <= cap
        tv -= 128

    # Megacore gate: only expose >=2 grid steps when each half is still >= 512
    # lanes wide; on single-TC v5e/v6e the extra step costs only ~0.35 us.
    if V // tv == 1 and (V // 2) % 128 == 0 and (V // 2) >= 512:
        tv = V // 2
    return tv


def linear_block_forward(x, weight, bias, voxel_indices=None, tile_v=None,
                         vmem_tile_budget_bytes=24 * 1024 * 1024):
    """x: (B, V, P) f32, weight: (1, n, P), bias: (1, n), voxel_indices: (V,) i32 or None."""
    B, V, P = x.shape
    n = weight.shape[1]

    if voxel_indices is None:                 # PyTorch's `...` default: all voxels
        assert V == n
        w_g = weight[0]                       # (V, P)
        b_g = bias                            # (1, V)
    else:
        # Tiny row gather (V*P + V floats) -- plain-JAX glue (see header TODO).
        w_g = weight[0][voxel_indices]        # (V, P)
        b_g = bias[:, voxel_indices]          # (1, V)

    # Layout fix: put the big V axis on the 128-lane dimension (see header TODO).
    x_t = jnp.transpose(x, (0, 2, 1))         # (B, P, V)
    w_t = jnp.transpose(w_g, (1, 0))          # (P, V)

    tv = tile_v if tile_v is not None else _pick_tile_v(B, P, V,
                                                        vmem_tile_budget_bytes)
    assert V % tv == 0, "voxel count must be divisible by the chosen tile"

    return pl.pallas_call(
        _linear_block_kernel,
        out_shape=jax.ShapeDtypeStruct((B, V), x.dtype),
        grid_spec=pltpu.PrefetchScalarGridSpec(
            num_scalar_prefetch=0,
            grid=(V // tv,),
            in_specs=[
                pl.BlockSpec((B, P, tv), lambda i: (0, 0, i)),  # x tile, lane-dense
                pl.BlockSpec((P, tv), lambda i: (0, i)),        # gathered weight tile
                pl.BlockSpec((1, tv), lambda i: (0, i)),        # gathered bias tile
            ],
            out_specs=pl.BlockSpec((B, tv), lambda i: (0, i)),  # lane-dense vst
        ),
        compiler_params=pltpu.CompilerParams(
            dimension_semantics=("parallel",),
            vmem_limit_bytes=32 * 1024 * 1024),
    )(x_t, w_t, b_g)


def reference_forward(x, weight, bias, voxel_indices=None):
    """Pure-JAX mirror of the PyTorch LinearBlock.forward."""
    if voxel_indices is None:
        w, b = weight, bias
    else:
        w = weight[:, voxel_indices, :]
        b = bias[:, voxel_indices]
    out = (x * w).mean(axis=-1)
    return out + b


def init_params(key, in_planes, n):
    # Matches nn.Linear(in_planes, n) default init, with the module's unsqueeze(0).
    bound = 1.0 / math.sqrt(in_planes)
    kw, kb = jax.random.split(key)
    weight = jax.random.uniform(kw, (1, n, in_planes), jnp.float32, -bound, bound)
    bias = jax.random.uniform(kb, (1, n), jnp.float32, -bound, bound)
    return weight, bias


if __name__ == "__main__":
    key = jax.random.PRNGKey(0)
    k_x, k_idx, k_params = jax.random.split(key, 3)

    B = 2          # batch
    P = 4          # in_planes
    N_VOX = 1024   # n: total voxels the module holds weights for
    V = 512        # voxels selected by voxel_indices for this call

    weight, bias = init_params(k_params, P, N_VOX)
    voxel_indices = jax.random.randint(k_idx, (V,), 0, N_VOX, dtype=jnp.int32)
    x = jax.random.normal(k_x, (B, V, P), jnp.float32)

    # Path 1: explicit voxel_indices (subset of voxels).
    out = linear_block_forward(x, weight, bias, voxel_indices)
    out = jax.block_until_ready(out)
    ref = reference_forward(x, weight, bias, voxel_indices)
    np.testing.assert_allclose(np.asarray(out), np.asarray(ref), rtol=1e-5, atol=1e-5)

    # Path 2: voxel_indices=None (the module's `...` default) over all voxels
    # (V=1024 here -> tile chooser halves to 512-wide tiles, 2 grid steps).
    x_full = jax.random.normal(k_x, (B, N_VOX, P), jnp.float32)
    out_full = linear_block_forward(x_full, weight, bias, None)
    out_full = jax.block_until_ready(out_full)
    ref_full = reference_forward(x_full, weight, bias, None)
    np.testing.assert_allclose(np.asarray(out_full), np.asarray(ref_full),
                               rtol=1e-5, atol=1e-5)

    print("KERNEL_OK")
</pallas_src>

<mosaic_0001>
module attributes {stable_mosaic.version = 11 : i64} {
  func.func @_linear_block_kernel(%arg0: i32, %arg1: memref<2x4x512xf32, #tpu.memory_space<vmem>>, %arg2: memref<4x512xf32, #tpu.memory_space<vmem>>, %arg3: memref<1x512xf32, #tpu.memory_space<vmem>>, %arg4: memref<2x512xf32, #tpu.memory_space<vmem>>) attributes {dimension_semantics = [#tpu.dimension_semantics<parallel>], iteration_bounds = array<i64: 1>, scalar_prefetch = 0 : i64, scratch_operands = 0 : i64, tpu.core_type = #tpu.core_type<tc>, window_params = [{transform_indices = @transform_0, window_bounds = array<i64: 2, 4, 512>}, {transform_indices = @transform_1, window_bounds = array<i64: 4, 512>}, {transform_indices = @transform_2, window_bounds = array<i64: 1, 512>}, {transform_indices = @transform_3, window_bounds = array<i64: 2, 512>}]} {
    %c0 = arith.constant 0 : index
    %c0_0 = arith.constant 0 : index
    %c0_1 = arith.constant 0 : index
    %0 = vector.load %arg1[%c0, %c0_0, %c0_1] : memref<2x4x512xf32, #tpu.memory_space<vmem>>, vector<2x4x512xf32>
    %c0_2 = arith.constant 0 : index
    %c0_3 = arith.constant 0 : index
    %1 = vector.load %arg2[%c0_2, %c0_3] : memref<4x512xf32, #tpu.memory_space<vmem>>, vector<4x512xf32>
    %2 = vector.extract_strided_slice %0 {offsets = [0, 0, 0], sizes = [2, 1, 512], strides = [1, 1, 1]} : vector<2x4x512xf32> to vector<2x1x512xf32>
    %3 = vector.shape_cast %2 : vector<2x1x512xf32> to vector<2x512xf32>
    %4 = vector.extract_strided_slice %1 {offsets = [0, 0], sizes = [1, 512], strides = [1, 1]} : vector<4x512xf32> to vector<1x512xf32>
    %5 = vector.broadcast %4 : vector<1x512xf32> to vector<2x512xf32>
    %6 = arith.mulf %3, %5 : vector<2x512xf32>
    %7 = vector.extract_strided_slice %0 {offsets = [0, 1, 0], sizes = [2, 1, 512], strides = [1, 1, 1]} : vector<2x4x512xf32> to vector<2x1x512xf32>
    %8 = vector.shape_cast %7 : vector<2x1x512xf32> to vector<2x512xf32>
    %9 = vector.extract_strided_slice %1 {offsets = [1, 0], sizes = [1, 512], strides = [1, 1]} : vector<4x512xf32> to vector<1x512xf32>
    %10 = vector.broadcast %9 : vector<1x512xf32> to vector<2x512xf32>
    %11 = arith.mulf %8, %10 : vector<2x512xf32>
    %12 = arith.addf %6, %11 : vector<2x512xf32>
    %13 = vector.extract_strided_slice %0 {offsets = [0, 2, 0], sizes = [2, 1, 512], strides = [1, 1, 1]} : vector<2x4x512xf32> to vector<2x1x512xf32>
    %14 = vector.shape_cast %13 : vector<2x1x512xf32> to vector<2x512xf32>
    %15 = vector.extract_strided_slice %1 {offsets = [2, 0], sizes = [1, 512], strides = [1, 1]} : vector<4x512xf32> to vector<1x512xf32>
    %16 = vector.broadcast %15 : vector<1x512xf32> to vector<2x512xf32>
    %17 = arith.mulf %14, %16 : vector<2x512xf32>
    %18 = arith.addf %12, %17 : vector<2x512xf32>
    %19 = vector.extract_strided_slice %0 {offsets = [0, 3, 0], sizes = [2, 1, 512], strides = [1, 1, 1]} : vector<2x4x512xf32> to vector<2x1x512xf32>
    %20 = vector.shape_cast %19 : vector<2x1x512xf32> to vector<2x512xf32>
    %21 = vector.extract_strided_slice %1 {offsets = [3, 0], sizes = [1, 512], strides = [1, 1]} : vector<4x512xf32> to vector<1x512xf32>
    %22 = vector.broadcast %21 : vector<1x512xf32> to vector<2x512xf32>
    %23 = arith.mulf %20, %22 : vector<2x512xf32>
    %24 = arith.addf %18, %23 : vector<2x512xf32>
    %cst = arith.constant 2.500000e-01 : f32
    %25 = vector.broadcast %cst : f32 to vector<2x512xf32>
    %26 = arith.mulf %24, %25 : vector<2x512xf32>
    %c0_4 = arith.constant 0 : index
    %c0_5 = arith.constant 0 : index
    %27 = vector.load %arg3[%c0_4, %c0_5] : memref<1x512xf32, #tpu.memory_space<vmem>>, vector<1x512xf32>
    %28 = vector.broadcast %27 : vector<1x512xf32> to vector<2x512xf32>
    %29 = arith.addf %26, %28 : vector<2x512xf32>
    %c0_6 = arith.constant 0 : index
    %c0_7 = arith.constant 0 : index
    %30 = vector.load %arg4[%c0_6, %c0_7] : memref<2x512xf32, #tpu.memory_space<vmem>>, vector<2x512xf32>
    tpu.vector_store %arg4[%c0_6, %c0_7], %29 {strides = array<i32>} : memref<2x512xf32, #tpu.memory_space<vmem>>, vector<2x512xf32>,
    return
  }
  func.func @transform_0(%arg0: i32) -> (i32, i32, i32) {
    %c0_i32 = arith.constant 0 : i32
    %c0_i32_0 = arith.constant 0 : i32
    %c0_i32_1 = arith.constant 0 : i32
    return %c0_i32, %c0_i32_0, %arg0 : i32, i32, i32
  }
  func.func @transform_1(%arg0: i32) -> (i32, i32) {
    %c0_i32 = arith.constant 0 : i32
    %c0_i32_0 = arith.constant 0 : i32
    return %c0_i32, %arg0 : i32, i32
  }
  func.func @transform_2(%arg0: i32) -> (i32, i32) {
    %c0_i32 = arith.constant 0 : i32
    %c0_i32_0 = arith.constant 0 : i32
    return %c0_i32, %arg0 : i32, i32
  }
  func.func @transform_3(%arg0: i32) -> (i32, i32) {
    %c0_i32 = arith.constant 0 : i32
    %c0_i32_0 = arith.constant 0 : i32
    return %c0_i32, %arg0 : i32, i32
  }
}

</mosaic_0001>

<llo_original>
// kernel: tpu_custom_call.1
$region0: #{tpu_custom_call.1}
  #allocation0 [shape = 'u32[]', space=smem, size = 0x4, offset = 0x4, fixed_abs, tag = 'smem constant byte address 0x4 - core index']
  #allocation1 [shape = 'u32[144,128]{1,0:T(1,128)}', space=vmem, size = 0x12000, scoped, tag = 'internal scratch']
  %s0 = inlined_call_operand.hbm [shape: f32[2,4,512], index: 0, kind: input, shape index: {}]
  %s1 = inlined_call_operand.hbm [shape: f32[4,512], index: 1, kind: input, shape index: {}]
  %s2 = inlined_call_operand.vmem [shape: f32[1,512], index: 2, kind: input, shape index: {}]
  %s3 = inlined_call_operand.hbm [shape: f32[2,512], index: 3, kind: output, shape index: {}]
  %s4 = sld [smem:[#allocation0]]
  $region30: #{tpu_custom_call.1} parent=0
    _
  %s6 = ssub.s32 1, %s4
  %s7 = scalar_select 0, %s6, %s4
  $region1: #{tpu_custom_call.1} parent=0
    #allocation2 [shape = 'u8[16384]{0}', space=vmem, size = 0x4000, scoped, tag = 'input window, operand 0, single buffered']
    #allocation3 [shape = 's32[1]{0}', space=sflag, size = 0x4, scoped, tag = 'scoped memory for tpu_custom_call.1']
    #allocation4 [shape = 's32[1]{0}', space=sflag, size = 0x4, scoped, tag = 'scoped memory for tpu_custom_call.1']
    #allocation5 [shape = 'u8[8192]{0}', space=vmem, size = 0x2000, scoped, tag = 'input window, operand 1, single buffered']
    #allocation6 [shape = 's32[1]{0}', space=sflag, size = 0x4, scoped, tag = 'scoped memory for tpu_custom_call.1']
    #allocation7 [shape = 'u8[4096]{0}', space=vmem, size = 0x1000, scoped, tag = 'output window, operand 0, single buffered']
    %8 = vsyncpa [#allocation3], 0
    %9 = vsyncpa [#allocation6], 0
    %10 = vsyncpa [#allocation4], 0
    // Predicated region
    $region2: #{tpu_custom_call.1} parent=1 // pred_check
      _
    $region3: #{tpu_custom_call.1} parent=1 // pred_check_branch
      %12 = sbr.rel (0) target = $region5
    $region4: #{tpu_custom_call.1} parent=1 // pred_region
      %s14 = ssub.s32 512, 512
      %15 = vsyncadd [#allocation3], %s14
      %s16 = sshll.u32 [#allocation2], 4
      %s17 = int_to_ptr.vmem [resolvable:$true] %s16
      %22 = dma.hbm_to_vmem [thread:$0]  %s0, 512, %s17, [#allocation3], 256, 256, 16
    $region5: #{tpu_custom_call.1} parent=1 // pred_fallthru
      _
    // Predicated region
    $region6: #{tpu_custom_call.1} parent=1 // pred_check
      _
    $region7: #{tpu_custom_call.1} parent=1 // pred_check_branch
      %24 = sbr.rel (0) target = $region9
    $region8: #{tpu_custom_call.1} parent=1 // pred_region
      %s26 = ssub.s32 256, 256
      %27 = vsyncadd [#allocation6], %s26
      %s29 = sshll.u32 [#allocation5], 4
      %s30 = int_to_ptr.vmem [resolvable:$true] %s29
      %32 = dma.hbm_to_vmem [thread:$0]  %s1, 256, %s30, [#allocation6]
    $region9: #{tpu_custom_call.1} parent=1 // pred_fallthru
      _
    // Predicated region
    $region10: #{tpu_custom_call.1} parent=1 // pred_check
      _
    $region11: #{tpu_custom_call.1} parent=1 // pred_check_branch
      %34 = sbr.rel (0) target = $region13
    $region12: #{tpu_custom_call.1} parent=1 // pred_region
      _
    $region13: #{tpu_custom_call.1} parent=1 // pred_fallthru
      _
    // Predicated region
    $region14: #{tpu_custom_call.1} parent=1 // pred_check
      _
    $region15: #{tpu_custom_call.1} parent=1 // pred_check_branch
      %36 = sbr.rel (0) target = $region17
    $region16: #{tpu_custom_call.1} parent=1 // pred_region
      %37 = dma.done [#allocation3], 512
    $region17: #{tpu_custom_call.1} parent=1 // pred_fallthru
      _
    // Predicated region
    $region18: #{tpu_custom_call.1} parent=1 // pred_check
      _
    $region19: #{tpu_custom_call.1} parent=1 // pred_check_branch
      %39 = sbr.rel (0) target = $region21
    $region20: #{tpu_custom_call.1} parent=1 // pred_region
      %40 = dma.done [#allocation6], 256
    $region21: #{tpu_custom_call.1} parent=1 // pred_fallthru
      _
    %v41 = vld [vmem:[#allocation2] sm:$0xff]
    %v42 = vld [vmem:[#allocation2 + $0x8] sm:$0xff]
    %v43 = vld [vmem:[#allocation2 + $0x10] sm:$0xff]
    %v44 = vld [vmem:[#allocation2 + $0x18] sm:$0xff]
    %v45 = vld [vmem:[#allocation5] sm:$0xff]
    %v46 = vld [vmem:[#allocation5 + $0x8] sm:$0xff]
    %v49 = vlaneseq
    %v50 = vshrl.u32 %v49, 7
    %v51 = vsub.s32 0, %v50
    %v52 = vrot.slane %v45, %v51
    %v53 = vlaneseq
    %v54 = vshrl.u32 %v53, 7
    %v55 = vsub.s32 4, %v54
    %v56 = vrot.slane %v45, %v55
    %v57 = vlaneseq
    %v58 = vshrl.u32 %v57, 7
    %v59 = vsub.s32 0, %v58
    %v60 = vrot.slane %v46, %v59
    %v61 = vlaneseq
    %v62 = vshrl.u32 %v61, 7
    %v63 = vsub.s32 4, %v62
    %v64 = vrot.slane %v46, %v63
    %v69 = vlaneseq
    %v70 = vshrl.u32 %v69, 7
    %v71 = vsub.s32 0, %v70
    %v72 = vrot.slane %v52, %v71
    %v73 = vlaneseq
    %v74 = vshrl.u32 %v73, 7
    %v75 = vsub.s32 0, %v74
    %v76 = vrot.slane %v56, %v75
    %v77 = vlaneseq
    %v78 = vshrl.u32 %v77, 7
    %v79 = vsub.s32 0, %v78
    %v80 = vrot.slane %v60, %v79
    %v81 = vlaneseq
    %v82 = vshrl.u32 %v81, 7
    %v83 = vsub.s32 0, %v82
    %v84 = vrot.slane %v64, %v83
    %v89 = vcombine.low %v72, %v76
    %v90 = vcombine.low %v80, %v84
    %v91 = vrot.slane %v89, 1
    %v92 = vrot.slane %v90, 1
    %v97 = vmul.f32 %v41, %v89
    %v98 = vmul.f32 %v42, %v90
    %v99 = vmul.f32 %v43, %v91
    %v100 = vmul.f32 %v44, %v92
    %v101 = vlaneseq
    %v102 = vshrl.u32 %v101, 7
    %v103 = vsub.s32 1, %v102
    %v104 = vrot.slane %v45, %v103
    %v105 = vlaneseq
    %v106 = vshrl.u32 %v105, 7
    %v107 = vsub.s32 5, %v106
    %v108 = vrot.slane %v45, %v107
    %v109 = vlaneseq
    %v110 = vshrl.u32 %v109, 7
    %v111 = vsub.s32 1, %v110
    %v112 = vrot.slane %v46, %v111
    %v113 = vlaneseq
    %v114 = vshrl.u32 %v113, 7
    %v115 = vsub.s32 5, %v114
    %v116 = vrot.slane %v46, %v115
    %v121 = vlaneseq
    %v122 = vshrl.u32 %v121, 7
    %v123 = vsub.s32 1, %v122
    %v124 = vrot.slane %v104, %v123
    %v125 = vlaneseq
    %v126 = vshrl.u32 %v125, 7
    %v127 = vsub.s32 1, %v126
    %v128 = vrot.slane %v108, %v127
    %v129 = vlaneseq
    %v130 = vshrl.u32 %v129, 7
    %v131 = vsub.s32 1, %v130
    %v132 = vrot.slane %v112, %v131
    %v133 = vlaneseq
    %v134 = vshrl.u32 %v133, 7
    %v135 = vsub.s32 1, %v134
    %v136 = vrot.slane %v116, %v135
    %v141 = vcombine.low %v124, %v128
    %v142 = vcombine.low %v132, %v136
    %v143 = vrot.slane %v141, 7
    %v144 = vrot.slane %v142, 7
    %v149 = vmul.f32 %v41, %v143
    %v150 = vmul.f32 %v42, %v144
    %v151 = vmul.f32 %v43, %v141
    %v152 = vmul.f32 %v44, %v142
    %v157 = vrot.slane %v149, 5
    %v158 = vrot.slane %v157, 4
    %v159 = vrot.slane %v150, 5
    %v160 = vrot.slane %v159, 4
    %v161 = vrot.slane %v151, 5
    %v162 = vrot.slane %v161, 4
    %v163 = vrot.slane %v152, 5
    %v164 = vrot.slane %v163, 4
    %v169 = vadd.f32 %v97, %v158
    %v170 = vadd.f32 %v98, %v160
    %v171 = vadd.f32 %v99, %v162
    %v172 = vadd.f32 %v100, %v164
    %v173 = vlaneseq
    %v174 = vshrl.u32 %v173, 7
    %v175 = vsub.s32 2, %v174
    %v176 = vrot.slane %v45, %v175
    %v177 = vlaneseq
    %v178 = vshrl.u32 %v177, 7
    %v179 = vsub.s32 6, %v178
    %v180 = vrot.slane %v45, %v179
    %v181 = vlaneseq
    %v182 = vshrl.u32 %v181, 7
    %v183 = vsub.s32 2, %v182
    %v184 = vrot.slane %v46, %v183
    %v185 = vlaneseq
    %v186 = vshrl.u32 %v185, 7
    %v187 = vsub.s32 6, %v186
    %v188 = vrot.slane %v46, %v187
    %v193 = vlaneseq
    %v194 = vshrl.u32 %v193, 7
    %v195 = vsub.s32 2, %v194
    %v196 = vrot.slane %v176, %v195
    %v197 = vlaneseq
    %v198 = vshrl.u32 %v197, 7
    %v199 = vsub.s32 2, %v198
    %v200 = vrot.slane %v180, %v199
    %v201 = vlaneseq
    %v202 = vshrl.u32 %v201, 7
    %v203 = vsub.s32 2, %v202
    %v204 = vrot.slane %v184, %v203
    %v205 = vlaneseq
    %v206 = vshrl.u32 %v205, 7
    %v207 = vsub.s32 2, %v206
    %v208 = vrot.slane %v188, %v207
    %v213 = vcombine.low %v196, %v200
    %v214 = vcombine.low %v204, %v208
    %v215 = vrot.slane %v213, 6
    %v216 = vrot.slane %v214, 6
    %v217 = vrot.slane %v213, 7
    %v218 = vrot.slane %v214, 7
    %v223 = vmul.f32 %v41, %v215
    %v224 = vmul.f32 %v42, %v216
    %v225 = vmul.f32 %v43, %v217
    %v226 = vmul.f32 %v44, %v218
    %v231 = vrot.slane %v223, 6
    %v232 = vrot.slane %v231, 4
    %v233 = vrot.slane %v224, 6
    %v234 = vrot.slane %v233, 4
    %v235 = vrot.slane %v225, 6
    %v236 = vrot.slane %v235, 4
    %v237 = vrot.slane %v226, 6
    %v238 = vrot.slane %v237, 4
    %v243 = vadd.f32 %v169, %v232
    %v244 = vadd.f32 %v170, %v234
    %v245 = vadd.f32 %v171, %v236
    %v246 = vadd.f32 %v172, %v238
    %v247 = vlaneseq
    %v248 = vshrl.u32 %v247, 7
    %v249 = vsub.s32 3, %v248
    %v250 = vrot.slane %v45, %v249
    %v251 = vlaneseq
    %v252 = vshrl.u32 %v251, 7
    %v253 = vsub.s32 7, %v252
    %v254 = vrot.slane %v45, %v253
    %v255 = vlaneseq
    %v256 = vshrl.u32 %v255, 7
    %v257 = vsub.s32 3, %v256
    %v258 = vrot.slane %v46, %v257
    %v259 = vlaneseq
    %v260 = vshrl.u32 %v259, 7
    %v261 = vsub.s32 7, %v260
    %v262 = vrot.slane %v46, %v261
    %v267 = vlaneseq
    %v268 = vshrl.u32 %v267, 7
    %v269 = vsub.s32 3, %v268
    %v270 = vrot.slane %v250, %v269
    %v271 = vlaneseq
    %v272 = vshrl.u32 %v271, 7
    %v273 = vsub.s32 3, %v272
    %v274 = vrot.slane %v254, %v273
    %v275 = vlaneseq
    %v276 = vshrl.u32 %v275, 7
    %v277 = vsub.s32 3, %v276
    %v278 = vrot.slane %v258, %v277
    %v279 = vlaneseq
    %v280 = vshrl.u32 %v279, 7
    %v281 = vsub.s32 3, %v280
    %v282 = vrot.slane %v262, %v281
    %v287 = vcombine.low %v270, %v274
    %v288 = vcombine.low %v278, %v282
    %v289 = vrot.slane %v287, 5
    %v290 = vrot.slane %v288, 5
    %v291 = vrot.slane %v287, 6
    %v292 = vrot.slane %v288, 6
    %v297 = vmul.f32 %v41, %v289
    %v298 = vmul.f32 %v42, %v290
    %v299 = vmul.f32 %v43, %v291
    %v300 = vmul.f32 %v44, %v292
    %v305 = vrot.slane %v297, 7
    %v306 = vrot.slane %v305, 4
    %v307 = vrot.slane %v298, 7
    %v308 = vrot.slane %v307, 4
    %v309 = vrot.slane %v299, 7
    %v310 = vrot.slane %v309, 4
    %v311 = vrot.slane %v300, 7
    %v312 = vrot.slane %v311, 4
    %v317 = vadd.f32 %v243, %v306
    %v318 = vadd.f32 %v244, %v308
    %v319 = vadd.f32 %v245, %v310
    %v320 = vadd.f32 %v246, %v312
    %v321 = vmul.f32 %v317, 0.25
    %v322 = vmul.f32 %v318, 0.25
    %v323 = vmul.f32 %v319, 0.25
    %v324 = vmul.f32 %v320, 0.25
    %v325 = vld [vmem:[%s2] sm:$0xf]
    %v327 = vlaneseq
    %v328 = vshrl.u32 %v327, 7
    %v329 = vsub.s32 0, %v328
    %v330 = vrot.slane %v325, %v329
    %v331 = vlaneseq
    %v332 = vshrl.u32 %v331, 7
    %v333 = vsub.s32 1, %v332
    %v334 = vrot.slane %v325, %v333
    %v335 = vlaneseq
    %v336 = vshrl.u32 %v335, 7
    %v337 = vsub.s32 2, %v336
    %v338 = vrot.slane %v325, %v337
    %v339 = vlaneseq
    %v340 = vshrl.u32 %v339, 7
    %v341 = vsub.s32 3, %v340
    %v342 = vrot.slane %v325, %v341
    %v343 = vcombine.low %v330, %v334
    %v344 = vcombine.low %v338, %v342
    %v345 = vrot.slane %v343, 1
    %v346 = vrot.slane %v344, 1
    %v351 = vadd.f32 %v321, %v343
    %v352 = vadd.f32 %v322, %v344
    %v353 = vadd.f32 %v323, %v345
    %v354 = vadd.f32 %v324, %v346
    %v360 = vunpack.c.l.s4 1983009808
    %v361 = vunpack.c.0.s8 %v360
    %v362 = vlaneseq
    %v363 = vshrl.u32 %v362, 7
    %v364 = vsub.s32 %v361, %v363
    %v365 = vrot.slane %v351, %v364
    %v367 = vunpack.c.l.s4 1983009808
    %v368 = vunpack.c.0.s8 %v367
    %v369 = vlaneseq
    %v370 = vshrl.u32 %v369, 7
    %v371 = vsub.s32 %v368, %v370
    %v372 = vrot.slane %v352, %v371
    %v373 = vcombine.low %v365, %v372
    %v375 = vunpack.c.l.s4 1983009808
    %v376 = vunpack.c.0.s8 %v375
    %v377 = vlaneseq
    %v378 = vshrl.u32 %v377, 7
    %v379 = vsub.s32 %v376, %v378
    %v380 = vrot.slane %v353, %v379
    %v382 = vunpack.c.l.s4 1983009808
    %v383 = vunpack.c.0.s8 %v382
    %v384 = vlaneseq
    %v385 = vshrl.u32 %v384, 7
    %v386 = vsub.s32 %v383, %v385
    %v387 = vrot.slane %v354, %v386
    %v388 = vcombine.low %v380, %v387
    %vm389 = vcmask 1044484
    %v390 = vsel %vm389, %v373, %v373
    %vm391 = vcmask 1046534
    %v392 = vsel %vm391, %v373, %v390
    %v393 = vrot.slane %v388, 7
    %vm394 = vcmask 1041409
    %v395 = vsel %vm394, %v393, %v392
    %vm396 = vcmask 1043459
    %v397 = vsel %vm396, %v393, %v395
    %vm398 = vcmask 1045509
    %v399 = vsel %vm398, %v393, %v397
    %vm400 = vcmask 1047559
    %v401 = vsel %vm400, %v393, %v399
    %403 = vst [vmem:[#allocation7] sm:$0xff] %v401
    // Predicated region
    $region22: #{tpu_custom_call.1} parent=1 // pred_check
      _
    $region23: #{tpu_custom_call.1} parent=1 // pred_check_branch
      %405 = sbr.rel (0) target = $region25
    $region24: #{tpu_custom_call.1} parent=1 // pred_region
      %s407 = ssub.s32 128, 128
      %408 = vsyncadd [#allocation4], %s407
      %s410 = sshll.u32 [#allocation7], 4
      %s411 = int_to_ptr.vmem [resolvable:$true] %s410
      %413 = dma.vmem_to_hbm [thread:$0]  %s411, 128, %s3, [#allocation4]
    $region25: #{tpu_custom_call.1} parent=1 // pred_fallthru
      _
    // Predicated region
    $region26: #{tpu_custom_call.1} parent=1 // pred_check
      _
    $region27: #{tpu_custom_call.1} parent=1 // pred_check_branch
      %415 = sbr.rel (0) target = $region29
    $region28: #{tpu_custom_call.1} parent=1 // pred_region
      %416 = dma.done [#allocation4], 128
    $region29: #{tpu_custom_call.1} parent=1 // pred_fallthru
      _
    %417 = vsyncpa [#allocation3], 1
    %418 = vsyncpa [#allocation6], 1
    %419 = vsyncpa [#allocation4], 1

</llo_original>
